<compile_context>
chip_gen: v6e
topology: v6e:2x2x1
jax: 0.10.0
libtpu: 0.0.40
codegen_flags: <defaults>
</compile_context>

<pallas_src>
import functools

import jax
import jax.numpy as jnp
from jax import lax
from jax.experimental import pallas as pl
from jax.experimental.pallas import tpu as pltpu


def _round_up(x, m):
    return ((x + m - 1) // m) * m


def _cluster_loss_kernel(k_ref, qT_ref, tgt_ref, out_ref,
                         m_sc, l_sc, p_sc, *,
                         inv_temp, n_rows, n_classes, tm, tn):
    i = pl.program_id(0)          # row tile   (parallel)
    j = pl.program_id(1)          # class tile (arbitrary / reduction)

    # ---- init online-softmax state for this row tile --------------------
    @pl.when(j == 0)
    def _():
        m_sc[...] = jnp.full_like(m_sc, -jnp.inf)
        l_sc[...] = jnp.zeros_like(l_sc)
        p_sc[...] = jnp.zeros_like(p_sc)

    # ---- (tm, Dp) @ (Dp, tn) on the MXU, f32 accumulate ------------------
    s = jnp.dot(k_ref[...], qT_ref[...], preferred_element_type=jnp.float32)
    s = s * jnp.float32(inv_temp)                                   # (tm, tn)

    # Mask padded class columns out of the softmax.
    classes = j * tn + lax.broadcasted_iota(jnp.int32, s.shape, 1)  # (tm, tn)
    s = jnp.where(classes < n_classes, s, jnp.float32(-1e30))

    # ---- online logsumexp update -----------------------------------------
    m_new = jnp.maximum(m_sc[...], jnp.max(s, axis=-1, keepdims=True))
    alpha = jnp.exp(m_sc[...] - m_new)                              # (tm, 1)
    l_sc[...] = alpha * l_sc[...] + jnp.sum(jnp.exp(s - m_new),
                                            axis=-1, keepdims=True)
    # logits[r, target[r]] via select + row reduce (no one-hot cast/multiply).
    p_sc[...] += jnp.sum(jnp.where(classes == tgt_ref[...], s, 0.0),
                         axis=-1, keepdims=True)
    m_sc[...] = m_new

    # ---- finalize this row tile ------------------------------------------
    @pl.when(j == pl.num_programs(1) - 1)
    def _():
        row_ids = i * tm + lax.broadcasted_iota(jnp.int32, (tm, 1), 0)
        per_row = m_sc[...] + jnp.log(l_sc[...]) - p_sc[...]        # (tm, 1)
        out_ref[...] = jnp.where(row_ids < n_rows, per_row, 0.0)


def cluster_loss(k, q, target, temperature, tm=256, tn=512, matmul_dtype=None):
    """k: (N, D), q: (M, D), target: (N,) int -> scalar f32 CE loss."""
    N, D = k.shape
    M, Dq = q.shape
    assert D == Dq

    # Lane-dense padding: features & class tiles to multiples of 128.
    Dp = _round_up(D, 128)
    tn = max(128, _round_up(min(tn, _round_up(M, 128)), 128))
    Mp = _round_up(M, tn)
    # Row tile: big by default, clamped & rounded to a multiple of 8 for tiny N.
    tm = max(8, _round_up(min(tm, _round_up(N, 8)), 8))
    Np = _round_up(N, tm)

    if matmul_dtype is not None:
        k = k.astype(matmul_dtype)
        q = q.astype(matmul_dtype)

    kp = jnp.pad(k, ((0, Np - N), (0, Dp - D)))                  # (Np, Dp)
    qTp = jnp.pad(q.T, ((0, Dp - D), (0, Mp - M)))               # (Dp, Mp)
    tgt = jnp.pad(target.astype(jnp.int32), (0, Np - N)).reshape(Np, 1)

    kernel = functools.partial(
        _cluster_loss_kernel,
        inv_temp=1.0 / float(temperature),
        n_rows=N, n_classes=M, tm=tm, tn=tn)

    per_row = pl.pallas_call(
        kernel,
        out_shape=jax.ShapeDtypeStruct((Np, 1), jnp.float32),
        grid_spec=pltpu.PrefetchScalarGridSpec(
            num_scalar_prefetch=0,
            grid=(Np // tm, Mp // tn),
            in_specs=[
                pl.BlockSpec((tm, Dp), lambda i, j: (i, 0)),   # streamed k rows
                pl.BlockSpec((Dp, tn), lambda i, j: (0, j)),   # q^T class tile
                pl.BlockSpec((tm, 1), lambda i, j: (i, 0)),    # streamed targets
            ],
            out_specs=pl.BlockSpec((tm, 1), lambda i, j: (i, 0)),
            scratch_shapes=[pltpu.VMEM((tm, 1), jnp.float32),   # running max
                            pltpu.VMEM((tm, 1), jnp.float32),   # running sumexp
                            pltpu.VMEM((tm, 1), jnp.float32)],  # picked logit
        ),
        compiler_params=pltpu.CompilerParams(
            # Row tiles are independent (megacore-shardable on v7x); the class
            # axis carries the online-softmax scratch -> "arbitrary".
            dimension_semantics=("parallel", "arbitrary"),
            # Explicit VMEM budget with headroom against v7x's 64 MiB/TC.
            vmem_limit_bytes=48 * 1024 * 1024,
        ),
    )(kp, qTp, tgt)

    # Single tiny reduction + mean in the wrapper (per-row partials already
    # have padded rows zeroed).
    return jnp.sum(per_row) / jnp.float32(N)


def cluster_loss_ref(k, q, target, temperature):
    logits = (k.astype(jnp.float32) @ q.astype(jnp.float32).T) / temperature
    lse = jax.nn.logsumexp(logits, axis=-1)
    picked = jnp.take_along_axis(
        logits, target[:, None].astype(jnp.int32), axis=-1)[:, 0]
    return jnp.mean(lse - picked)


if __name__ == "__main__":
    key = jax.random.PRNGKey(0)
    temperature = 0.5

    # --- small shapes consistent with the module: N samples, M prototypes ---
    N, M, D = 18, 8, 32
    kk, kq, kt = jax.random.split(key, 3)
    k = jax.random.normal(kk, (N, D), dtype=jnp.float32)
    q = jax.random.normal(kq, (M, D), dtype=jnp.float32)
    target = jax.random.randint(kt, (N,), 0, M, dtype=jnp.int32)

    ref = jax.block_until_ready(cluster_loss_ref(k, q, target, temperature))

    # Default config: single row tile, single class tile.
    loss = jax.block_until_ready(cluster_loss(k, q, target, temperature))
    assert jnp.allclose(loss, ref, atol=1e-4, rtol=1e-4), (loss, ref)

    # Multi row-tile config: exercises the per-row-tile finalize path.
    loss_tiled = jax.block_until_ready(
        cluster_loss(k, q, target, temperature, tm=8))
    assert jnp.allclose(loss_tiled, ref, atol=1e-4, rtol=1e-4), (loss_tiled, ref)

    # Multi class-tile config: exercises the online (flash-style) logsumexp.
    M2 = 200
    kq2, kt2 = jax.random.split(kq)
    q2 = jax.random.normal(kq2, (M2, D), dtype=jnp.float32)
    target2 = jax.random.randint(kt2, (N,), 0, M2, dtype=jnp.int32)
    ref2 = jax.block_until_ready(cluster_loss_ref(k, q2, target2, temperature))
    loss2 = jax.block_until_ready(
        cluster_loss(k, q2, target2, temperature, tm=8, tn=128))
    assert jnp.allclose(loss2, ref2, atol=1e-4, rtol=1e-4), (loss2, ref2)

    # bf16-matmul path (v5e/v6e option): just check it runs and stays finite.
    loss_bf16 = jax.block_until_ready(
        cluster_loss(k, q, target, temperature, matmul_dtype=jnp.bfloat16))
    assert bool(jnp.isfinite(loss_bf16)), loss_bf16

    print("KERNEL_OK")
</pallas_src>

<mosaic_0001>
module attributes {stable_mosaic.version = 11 : i64} {
  func.func @_cluster_loss_kernel(%arg0: i32, %arg1: i32, %arg2: memref<24x128xf32, #tpu.memory_space<vmem>>, %arg3: memref<128x128xf32, #tpu.memory_space<vmem>>, %arg4: memref<24x1xi32, #tpu.memory_space<vmem>>, %arg5: memref<24x1xf32, #tpu.memory_space<vmem>>, %arg6: memref<24x1xf32, #tpu.memory_space<vmem>>, %arg7: memref<24x1xf32, #tpu.memory_space<vmem>>, %arg8: memref<24x1xf32, #tpu.memory_space<vmem>>) attributes {dimension_semantics = [#tpu.dimension_semantics<parallel>, #tpu.dimension_semantics<arbitrary>], iteration_bounds = array<i64: 1, 1>, scalar_prefetch = 0 : i64, scratch_operands = 3 : i64, tpu.core_type = #tpu.core_type<tc>, window_params = [{transform_indices = @transform_0, window_bounds = array<i64: 24, 128>}, {transform_indices = @transform_1, window_bounds = array<i64: 128, 128>}, {transform_indices = @transform_2, window_bounds = array<i64: 24, 1>}, {transform_indices = @transform_3, window_bounds = array<i64: 24, 1>}]} {
    %c0_i32 = arith.constant 0 : i32
    %0 = arith.cmpi eq, %arg1, %c0_i32 : i32
    %1 = arith.extui %0 : i1 to i32
    %c0_i32_0 = arith.constant 0 : i32
    %2 = arith.cmpi ne, %1, %c0_i32_0 : i32
    scf.if %2 {
      %cst_28 = arith.constant 0xFF800000 : f32
      %46 = vector.broadcast %cst_28 : f32 to vector<24x1xf32>
      %c0_29 = arith.constant 0 : index
      %c0_30 = arith.constant 0 : index
      %47 = vector.load %arg6[%c0_29, %c0_30] : memref<24x1xf32, #tpu.memory_space<vmem>>, vector<24x1xf32>
      tpu.vector_store %arg6[%c0_29, %c0_30], %46 {strides = array<i32>} : memref<24x1xf32, #tpu.memory_space<vmem>>, vector<24x1xf32>,
      %cst_31 = arith.constant 0.000000e+00 : f32
      %48 = vector.broadcast %cst_31 : f32 to vector<24x1xf32>
      %c0_32 = arith.constant 0 : index
      %c0_33 = arith.constant 0 : index
      %49 = vector.load %arg7[%c0_32, %c0_33] : memref<24x1xf32, #tpu.memory_space<vmem>>, vector<24x1xf32>
      tpu.vector_store %arg7[%c0_32, %c0_33], %48 {strides = array<i32>} : memref<24x1xf32, #tpu.memory_space<vmem>>, vector<24x1xf32>,
      %cst_34 = arith.constant 0.000000e+00 : f32
      %50 = vector.broadcast %cst_34 : f32 to vector<24x1xf32>
      %c0_35 = arith.constant 0 : index
      %c0_36 = arith.constant 0 : index
      %51 = vector.load %arg8[%c0_35, %c0_36] : memref<24x1xf32, #tpu.memory_space<vmem>>, vector<24x1xf32>
      tpu.vector_store %arg8[%c0_35, %c0_36], %50 {strides = array<i32>} : memref<24x1xf32, #tpu.memory_space<vmem>>, vector<24x1xf32>,
    } else {
    }
    %c0 = arith.constant 0 : index
    %c0_1 = arith.constant 0 : index
    %3 = vector.load %arg2[%c0, %c0_1] : memref<24x128xf32, #tpu.memory_space<vmem>>, vector<24x128xf32>
    %c0_2 = arith.constant 0 : index
    %c0_3 = arith.constant 0 : index
    %4 = vector.load %arg3[%c0_2, %c0_3] : memref<128x128xf32, #tpu.memory_space<vmem>>, vector<128x128xf32>
    %cst = arith.constant dense<0.000000e+00> : vector<24x128xf32>
    %5 = tpu.matmul %3, %4, %cst {dimension_numbers = #tpu.dot_dimension_numbers<[1], [0], [0], [1], [0, 0, 1, 1], [], []>} : vector<24x128xf32>, vector<128x128xf32>, vector<24x128xf32> -> vector<24x128xf32>
    %cst_4 = arith.constant 2.000000e+00 : f32
    %6 = vector.broadcast %cst_4 : f32 to vector<24x128xf32>
    %7 = arith.mulf %5, %6 : vector<24x128xf32>
    %c128_i32 = arith.constant 128 : i32
    %8 = arith.muli %arg1, %c128_i32 : i32
    %9 = tpu.iota {dimensions = array<i32: 1>} : vector<24x128xi32>
    %10 = vector.broadcast %8 : i32 to vector<24x128xi32>
    %11 = arith.addi %10, %9 : vector<24x128xi32>
    %c8_i32 = arith.constant 8 : i32
    %12 = vector.broadcast %c8_i32 : i32 to vector<24x128xi32>
    %13 = arith.cmpi slt, %11, %12 : vector<24x128xi32>
    %cst_5 = arith.constant -1.000000e+30 : f32
    %14 = vector.broadcast %cst_5 : f32 to vector<24x128xf32>
    %15 = arith.select %13, %7, %14 : vector<24x128xi1>, vector<24x128xf32>
    %c0_6 = arith.constant 0 : index
    %c0_7 = arith.constant 0 : index
    %16 = vector.load %arg6[%c0_6, %c0_7] : memref<24x1xf32, #tpu.memory_space<vmem>>, vector<24x1xf32>
    %cst_8 = arith.constant dense<0xFF800000> : vector<24xf32>
    %17 = vector.multi_reduction <maximumf>, %15, %cst_8 [1] : vector<24x128xf32> to vector<24xf32>
    %18 = vector.shape_cast %17 : vector<24xf32> to vector<24x1xf32>
    %19 = arith.maximumf %16, %18 : vector<24x1xf32>
    %c0_9 = arith.constant 0 : index
    %c0_10 = arith.constant 0 : index
    %20 = vector.load %arg6[%c0_9, %c0_10] : memref<24x1xf32, #tpu.memory_space<vmem>>, vector<24x1xf32>
    %21 = arith.subf %20, %19 : vector<24x1xf32>
    %22 = math.exp %21 : vector<24x1xf32>
    %c0_11 = arith.constant 0 : index
    %c0_12 = arith.constant 0 : index
    %23 = vector.load %arg7[%c0_11, %c0_12] : memref<24x1xf32, #tpu.memory_space<vmem>>, vector<24x1xf32>
    %24 = arith.mulf %22, %23 : vector<24x1xf32>
    %25 = vector.broadcast %19 : vector<24x1xf32> to vector<24x128xf32>
    %26 = arith.subf %15, %25 : vector<24x128xf32>
    %27 = math.exp %26 : vector<24x128xf32>
    %cst_13 = arith.constant dense<0.000000e+00> : vector<24xf32>
    %28 = vector.multi_reduction <add>, %27, %cst_13 [1] : vector<24x128xf32> to vector<24xf32>
    %29 = vector.shape_cast %28 : vector<24xf32> to vector<24x1xf32>
    %30 = arith.addf %24, %29 : vector<24x1xf32>
    %c0_14 = arith.constant 0 : index
    %c0_15 = arith.constant 0 : index
    %31 = vector.load %arg7[%c0_14, %c0_15] : memref<24x1xf32, #tpu.memory_space<vmem>>, vector<24x1xf32>
    tpu.vector_store %arg7[%c0_14, %c0_15], %30 {strides = array<i32>} : memref<24x1xf32, #tpu.memory_space<vmem>>, vector<24x1xf32>,
    %c0_16 = arith.constant 0 : index
    %c0_17 = arith.constant 0 : index
    %32 = vector.load %arg8[%c0_16, %c0_17] : memref<24x1xf32, #tpu.memory_space<vmem>>, vector<24x1xf32>
    %c0_18 = arith.constant 0 : index
    %c0_19 = arith.constant 0 : index
    %33 = vector.load %arg4[%c0_18, %c0_19] : memref<24x1xi32, #tpu.memory_space<vmem>>, vector<24x1xi32>
    %34 = vector.broadcast %33 : vector<24x1xi32> to vector<24x128xi32>
    %35 = arith.cmpi eq, %11, %34 : vector<24x128xi32>
    %cst_20 = arith.constant 0.000000e+00 : f32
    %36 = vector.broadcast %cst_20 : f32 to vector<24x128xf32>
    %37 = arith.select %35, %15, %36 : vector<24x128xi1>, vector<24x128xf32>
    %cst_21 = arith.constant dense<0.000000e+00> : vector<24xf32>
    %38 = vector.multi_reduction <add>, %37, %cst_21 [1] : vector<24x128xf32> to vector<24xf32>
    %39 = vector.shape_cast %38 : vector<24xf32> to vector<24x1xf32>
    %40 = arith.addf %32, %39 : vector<24x1xf32>
    %c0_22 = arith.constant 0 : index
    %c0_23 = arith.constant 0 : index
    %41 = vector.load %arg8[%c0_22, %c0_23] : memref<24x1xf32, #tpu.memory_space<vmem>>, vector<24x1xf32>
    tpu.vector_store %arg8[%c0_22, %c0_23], %40 {strides = array<i32>} : memref<24x1xf32, #tpu.memory_space<vmem>>, vector<24x1xf32>,
    %c0_24 = arith.constant 0 : index
    %c0_25 = arith.constant 0 : index
    %42 = vector.load %arg6[%c0_24, %c0_25] : memref<24x1xf32, #tpu.memory_space<vmem>>, vector<24x1xf32>
    tpu.vector_store %arg6[%c0_24, %c0_25], %19 {strides = array<i32>} : memref<24x1xf32, #tpu.memory_space<vmem>>, vector<24x1xf32>,
    %c0_i32_26 = arith.constant 0 : i32
    %43 = arith.cmpi eq, %arg1, %c0_i32_26 : i32
    %44 = arith.extui %43 : i1 to i32
    %c0_i32_27 = arith.constant 0 : i32
    %45 = arith.cmpi ne, %44, %c0_i32_27 : i32
    scf.if %45 {
      %c24_i32 = arith.constant 24 : i32
      %46 = arith.muli %arg0, %c24_i32 : i32
      %47 = tpu.iota {dimensions = array<i32: 0>} : vector<24x1xi32>
      %48 = vector.broadcast %46 : i32 to vector<24x1xi32>
      %49 = arith.addi %48, %47 : vector<24x1xi32>
      %c0_28 = arith.constant 0 : index
      %c0_29 = arith.constant 0 : index
      %50 = vector.load %arg6[%c0_28, %c0_29] : memref<24x1xf32, #tpu.memory_space<vmem>>, vector<24x1xf32>
      %c0_30 = arith.constant 0 : index
      %c0_31 = arith.constant 0 : index
      %51 = vector.load %arg7[%c0_30, %c0_31] : memref<24x1xf32, #tpu.memory_space<vmem>>, vector<24x1xf32>
      %52 = math.log %51 : vector<24x1xf32>
      %53 = arith.addf %50, %52 : vector<24x1xf32>
      %c0_32 = arith.constant 0 : index
      %c0_33 = arith.constant 0 : index
      %54 = vector.load %arg8[%c0_32, %c0_33] : memref<24x1xf32, #tpu.memory_space<vmem>>, vector<24x1xf32>
      %55 = arith.subf %53, %54 : vector<24x1xf32>
      %c18_i32 = arith.constant 18 : i32
      %56 = vector.broadcast %c18_i32 : i32 to vector<24x1xi32>
      %57 = arith.cmpi slt, %49, %56 : vector<24x1xi32>
      %cst_34 = arith.constant 0.000000e+00 : f32
      %58 = vector.broadcast %cst_34 : f32 to vector<24x1xf32>
      %59 = arith.select %57, %55, %58 : vector<24x1xi1>, vector<24x1xf32>
      %c0_35 = arith.constant 0 : index
      %c0_36 = arith.constant 0 : index
      %60 = vector.load %arg5[%c0_35, %c0_36] : memref<24x1xf32, #tpu.memory_space<vmem>>, vector<24x1xf32>
      tpu.vector_store %arg5[%c0_35, %c0_36], %59 {strides = array<i32>} : memref<24x1xf32, #tpu.memory_space<vmem>>, vector<24x1xf32>,
    } else {
    }
    return
  }
  func.func @transform_0(%arg0: i32, %arg1: i32) -> (i32, i32) {
    %c0_i32 = arith.constant 0 : i32
    %c0_i32_0 = arith.constant 0 : i32
    return %arg0, %c0_i32 : i32, i32
  }
  func.func @transform_1(%arg0: i32, %arg1: i32) -> (i32, i32) {
    %c0_i32 = arith.constant 0 : i32
    %c0_i32_0 = arith.constant 0 : i32
    return %c0_i32, %arg1 : i32, i32
  }
  func.func @transform_2(%arg0: i32, %arg1: i32) -> (i32, i32) {
    %c0_i32 = arith.constant 0 : i32
    %c0_i32_0 = arith.constant 0 : i32
    return %arg0, %c0_i32 : i32, i32
  }
  func.func @transform_3(%arg0: i32, %arg1: i32) -> (i32, i32) {
    %c0_i32 = arith.constant 0 : i32
    %c0_i32_0 = arith.constant 0 : i32
    return %arg0, %c0_i32 : i32, i32
  }
}

</mosaic_0001>

<llo_original>
// kernel: tpu_custom_call.1
$region0: #{tpu_custom_call.1}
  #allocation0 [shape = 'u32[]', space=smem, size = 0x4, offset = 0x4, fixed_abs, tag = 'smem constant byte address 0x4 - core index']
  #allocation1 [shape = 'u32[144,128]{1,0:T(1,128)}', space=vmem, size = 0x12000, scoped, tag = 'internal scratch']
  #allocation2 [shape = 'f32[24,1]{1,0:T(8,128)}', space=vmem, size = 0x3000, scoped, tag = 'scratch operand']
  #allocation3 [shape = 'f32[24,1]{1,0:T(8,128)}', space=vmem, size = 0x3000, scoped, tag = 'scratch operand']
  #allocation4 [shape = 'f32[24,1]{1,0:T(8,128)}', space=vmem, size = 0x3000, scoped, tag = 'scratch operand']
  %s0 = inlined_call_operand.vmem [shape: f32[24,128], index: 0, kind: input, shape index: {}]
  %s1 = inlined_call_operand.hbm [shape: f32[128,128], index: 1, kind: input, shape index: {}]
  %s2 = inlined_call_operand.vmem [shape: s32[24,1], index: 2, kind: input, shape index: {}]
  %s3 = inlined_call_operand.vmem [shape: f32[24,1], index: 3, kind: output, shape index: {}]
  %s4 = sld [smem:[#allocation0]]
  $region34: #{tpu_custom_call.1} parent=0
    _
  %s6 = ssub.s32 1, %s4
  %s7 = scalar_select 0, %s6, %s4
  $region1: #{tpu_custom_call.1} parent=0
    #allocation5 [shape = 'u8[65536]{0}', space=vmem, size = 0x10000, scoped, tag = 'input window, operand 1, single buffered']
    #allocation6 [shape = 's32[1]{0}', space=sflag, size = 0x4, scoped, tag = 'scoped memory for tpu_custom_call.1']
    %8 = vsyncpa [#allocation6], 0
    // Predicated region
    $region2: #{tpu_custom_call.1} parent=1 // pred_check
      _
    $region3: #{tpu_custom_call.1} parent=1 // pred_check_branch
      %10 = sbr.rel (0) target = $region5
    $region4: #{tpu_custom_call.1} parent=1 // pred_region
      _
    $region5: #{tpu_custom_call.1} parent=1 // pred_fallthru
      _
    // Predicated region
    $region6: #{tpu_custom_call.1} parent=1 // pred_check
      _
    $region7: #{tpu_custom_call.1} parent=1 // pred_check_branch
      %12 = sbr.rel (0) target = $region9
    $region8: #{tpu_custom_call.1} parent=1 // pred_region
      %s14 = ssub.s32 2048, 2048
      %15 = vsyncadd [#allocation6], %s14
      %s16 = sshll.u32 [#allocation5], 4
      %s17 = int_to_ptr.vmem [resolvable:$true] %s16
      %22 = dma.hbm_to_vmem [thread:$0]  %s1, 2048, %s17, [#allocation6], 128, 128, 8
    $region9: #{tpu_custom_call.1} parent=1 // pred_fallthru
      _
    // Predicated region
    $region10: #{tpu_custom_call.1} parent=1 // pred_check
      _
    $region11: #{tpu_custom_call.1} parent=1 // pred_check_branch
      %24 = sbr.rel (0) target = $region13
    $region12: #{tpu_custom_call.1} parent=1 // pred_region
      _
    $region13: #{tpu_custom_call.1} parent=1 // pred_fallthru
      _
    // Predicated region
    $region14: #{tpu_custom_call.1} parent=1 // pred_check
      _
    $region15: #{tpu_custom_call.1} parent=1 // pred_check_branch
      %26 = sbr.rel (0) target = $region17
    $region16: #{tpu_custom_call.1} parent=1 // pred_region
      %27 = dma.done [#allocation6], 2048
    $region17: #{tpu_custom_call.1} parent=1 // pred_fallthru
      _
    %p28 = scmp.eq.s32.totalorder 0, 0
    // Predicated region
    $region18: #{tpu_custom_call.1} parent=1 // pred_check
      %p29 = pneg %p28
    $region19: #{tpu_custom_call.1} parent=1 // pred_check_branch
      %31 = sbr.rel (%p29) target = $region21
    $region20: #{tpu_custom_call.1} parent=1 // pred_region
      %vm32 = vcmask 7168
      %33 = vst.msk [vmem:[#allocation2] sm:$0xff] %vm32, -inf
      %34 = vst.msk [vmem:[#allocation2 + $0x8] sm:$0xff] %vm32, -inf
      %35 = vst.msk [vmem:[#allocation2 + $0x10] sm:$0xff] %vm32, -inf
      %36 = vst.msk [vmem:[#allocation3] sm:$0xff] %vm32, 0.0
      %37 = vst.msk [vmem:[#allocation3 + $0x8] sm:$0xff] %vm32, 0.0
      %38 = vst.msk [vmem:[#allocation3 + $0x10] sm:$0xff] %vm32, 0.0
      %39 = vst.msk [vmem:[#allocation4] sm:$0xff] %vm32, 0.0
      %40 = vst.msk [vmem:[#allocation4 + $0x8] sm:$0xff] %vm32, 0.0
      %41 = vst.msk [vmem:[#allocation4 + $0x10] sm:$0xff] %vm32, 0.0
    $region21: #{tpu_custom_call.1} parent=1 // pred_fallthru
      _
    %v42 = vld [vmem:[%s0] sm:$0xff]
    %v43 = vld [vmem:[%s0 + $0x8] sm:$0xff]
    %v44 = vld [vmem:[%s0 + $0x10] sm:$0xff]
    %v45 = vld [vmem:[#allocation5] sm:$0xff]
    %v46 = vld [vmem:[#allocation5 + $0x8] sm:$0xff]
    %v47 = vld [vmem:[#allocation5 + $0x10] sm:$0xff]
    %v48 = vld [vmem:[#allocation5 + $0x18] sm:$0xff]
    %v49 = vld [vmem:[#allocation5 + $0x20] sm:$0xff]
    %v50 = vld [vmem:[#allocation5 + $0x28] sm:$0xff]
    %v51 = vld [vmem:[#allocation5 + $0x30] sm:$0xff]
    %v52 = vld [vmem:[#allocation5 + $0x38] sm:$0xff]
    %v53 = vld [vmem:[#allocation5 + $0x40] sm:$0xff]
    %v54 = vld [vmem:[#allocation5 + $0x48] sm:$0xff]
    %v55 = vld [vmem:[#allocation5 + $0x50] sm:$0xff]
    %v56 = vld [vmem:[#allocation5 + $0x58] sm:$0xff]
    %v57 = vld [vmem:[#allocation5 + $0x60] sm:$0xff]
    %v58 = vld [vmem:[#allocation5 + $0x68] sm:$0xff]
    %v59 = vld [vmem:[#allocation5 + $0x70] sm:$0xff]
    %v60 = vld [vmem:[#allocation5 + $0x78] sm:$0xff]
    %61 = vmatprep.subr.mxu0 0.0
    %62 = vmatpush1.msra.mxu0 %v60
    %63 = vmatprep.subr.mxu0 0.0
    %64 = vmatpush1.msra.mxu0 %v59
    %65 = vmatprep.subr.mxu0 0.0
    %66 = vmatpush1.msra.mxu0 %v58
    %67 = vmatprep.subr.mxu0 0.0
    %68 = vmatpush1.msra.mxu0 %v57
    %69 = vmatprep.subr.mxu0 0.0
    %70 = vmatpush1.msra.mxu0 %v56
    %71 = vmatprep.subr.mxu0 0.0
    %72 = vmatpush1.msra.mxu0 %v55
    %73 = vmatprep.subr.mxu0 0.0
    %74 = vmatpush1.msra.mxu0 %v54
    %75 = vmatprep.subr.mxu0 0.0
    %76 = vmatpush1.msra.mxu0 %v53
    %77 = vmatprep.subr.mxu0 0.0
    %78 = vmatpush1.msra.mxu0 %v52
    %79 = vmatprep.subr.mxu0 0.0
    %80 = vmatpush1.msra.mxu0 %v51
    %81 = vmatprep.subr.mxu0 0.0
    %82 = vmatpush1.msra.mxu0 %v50
    %83 = vmatprep.subr.mxu0 0.0
    %84 = vmatpush1.msra.mxu0 %v49
    %85 = vmatprep.subr.mxu0 0.0
    %86 = vmatpush1.msra.mxu0 %v48
    %87 = vmatprep.subr.mxu0 0.0
    %88 = vmatpush1.msra.mxu0 %v47
    %89 = vmatprep.subr.mxu0 0.0
    %90 = vmatpush1.msra.mxu0 %v46
    %91 = vmatprep.subr.mxu0 0.0
    %92 = vmatpush1.msra.mxu0 %v45
    %93 = vmatprep.subr.mxu0 0.0
    %94 = vmatpush2.msra.mxu0 0.0
    %95 = vmatprep.subr.mxu0 0.0
    %96 = vmatpush2.msra.mxu0 0.0
    %97 = vmatprep.subr.mxu0 0.0
    %98 = vmatpush2.msra.mxu0 0.0
    %99 = vmatprep.subr.mxu0 0.0
    %100 = vmatpush2.msra.mxu0 0.0
    %101 = vmatprep.subr.mxu0 0.0
    %102 = vmatpush2.msra.mxu0 0.0
    %103 = vmatprep.subr.mxu0 0.0
    %104 = vmatpush2.msra.mxu0 0.0
    %105 = vmatprep.subr.mxu0 0.0
    %106 = vmatpush2.msra.mxu0 0.0
    %107 = vmatprep.subr.mxu0 0.0
    %108 = vmatpush2.msra.mxu0 0.0
    %109 = vmatprep.subr.mxu0 0.0
    %110 = vmatpush2.msra.mxu0 0.0
    %111 = vmatprep.subr.mxu0 0.0
    %112 = vmatpush2.msra.mxu0 0.0
    %113 = vmatprep.subr.mxu0 0.0
    %114 = vmatpush2.msra.mxu0 0.0
    %115 = vmatprep.subr.mxu0 0.0
    %116 = vmatpush2.msra.mxu0 0.0
    %117 = vmatprep.subr.mxu0 0.0
    %118 = vmatpush2.msra.mxu0 0.0
    %119 = vmatprep.subr.mxu0 0.0
    %120 = vmatpush2.msra.mxu0 0.0
    %121 = vmatprep.subr.mxu0 0.0
    %122 = vmatpush2.msra.mxu0 0.0
    %123 = vmatprep.subr.mxu0 0.0
    %124 = vmatpush2.msra.mxu0 0.0
    %125 = vmatprep.mubr.f32.mxu0 0.0
    %126 = vmatmul.mubr.f32.gmra.mxu0 %v42
    %v127 = vpop.f32.mrf.mxu0
    %v128 = vadd.f32 0.0, %v127
    %v129 = vpop.f32.mrf.mxu0
    %130 = vmatprep.mubr.f32.mxu0 0.0
    %131 = vmatmul.mubr.f32.gmra.mxu0 %v43
    %v132 = vpop.f32.mrf.mxu0
    %v133 = vadd.f32 0.0, %v132
    %v134 = vpop.f32.mrf.mxu0
    %135 = vmatprep.mubr.f32.mxu0 0.0
    %136 = vmatmul.mubr.f32.gmra.mxu0 %v44
    %v137 = vpop.f32.mrf.mxu0
    %v138 = vadd.f32 0.0, %v137
    %v139 = vpop.f32.mrf.mxu0
    %140 = vdwg.mxu0
    %v141 = vmul.f32 %v128, 2.0
    %v142 = vmul.f32 %v133, 2.0
    %v143 = vmul.f32 %v138, 2.0
    %s144 = smul.u32 0, 128
    %v145 = vlaneseq
    %v146 = vand.u32 %v145, 127
    %v147 = vstv %s144
    %v148 = vadd.s32 %v147, %v146
    %vm149 = vcmp.lt.s32.totalorder %v148, 8
    %v150 = vsel %vm149, %v141, -1e+30
    %v151 = vsel %vm149, %v142, -1e+30
    %v152 = vsel %vm149, %v143, -1e+30
    %v153 = vld [vmem:[#allocation2] sm:$0xff]
    %v154 = vld [vmem:[#allocation2 + $0x8] sm:$0xff]
    %v155 = vld [vmem:[#allocation2 + $0x10] sm:$0xff]
    %156 = vmax.xlane.f32.xlu0 %v150
    %v157 = vpop.xlane.xlu0 %156
    %158 = vmax.xlane.f32.xlu0 %v151
    %v159 = vpop.xlane.xlu0 %158
    %160 = vmax.xlane.f32.xlu0 %v152
    %v161 = vpop.xlane.xlu0 %160
    %v162 = vmax.f32 %v153, %v157
    %v163 = vmax.f32 %v154, %v159
    %v164 = vmax.f32 %v155, %v161
    %v165 = vsub.f32 %v153, %v162
    %v166 = vsub.f32 %v154, %v163
    %v167 = vsub.f32 %v155, %v164
    %v168 = vmul.f32 %v165, 1.442695
    %v169 = vpow.pop %v168
    %v170 = vmul.f32 %v166, 1.442695
    %v171 = vpow.pop %v170
    %v172 = vmul.f32 %v167, 1.442695
    %v173 = vpow.pop %v172
    %v174 = vld [vmem:[#allocation3] sm:$0xff]
    %v175 = vld [vmem:[#allocation3 + $0x8] sm:$0xff]
    %v176 = vld [vmem:[#allocation3 + $0x10] sm:$0xff]
    %v177 = vmul.f32 %v169, %v174
    %v178 = vmul.f32 %v171, %v175
    %v179 = vmul.f32 %v173, %v176
    %181 = vset.pattern.permute.xlu0 0
    %182 = vperm.xlu0 %181, %v162
    %v183 = vpop.permute.xlu0 %182
    %186 = vset.pattern.permute.xlu0 0
    %187 = vperm.xlu0 %186, %v163
    %v188 = vpop.permute.xlu0 %187
    %191 = vset.pattern.permute.xlu0 0
    %192 = vperm.xlu0 %191, %v164
    %v193 = vpop.permute.xlu0 %192
    %v195 = vsub.f32 %v150, %v183
    %v196 = vsub.f32 %v151, %v188
    %v197 = vsub.f32 %v152, %v193
    %v198 = vmul.f32 %v195, 1.442695
    %v199 = vpow.pop %v198
    %v200 = vmul.f32 %v196, 1.442695
    %v201 = vpow.pop %v200
    %v202 = vmul.f32 %v197, 1.442695
    %v203 = vpow.pop %v202
    %204 = vadd.xlane.f32.xlu0 %v199
    %v205 = vpop.xlane.xlu0 %204
    %206 = vadd.xlane.f32.xlu0 %v201
    %v207 = vpop.xlane.xlu0 %206
    %208 = vadd.xlane.f32.xlu0 %v203
    %v209 = vpop.xlane.xlu0 %208
    %v210 = vadd.f32 %v177, %v205
    %v211 = vadd.f32 %v178, %v207
    %v212 = vadd.f32 %v179, %v209
    %vm213 = vcmask 7168
    %214 = vst.msk [vmem:[#allocation3] sm:$0xff] %vm213, %v210
    %215 = vst.msk [vmem:[#allocation3 + $0x8] sm:$0xff] %vm213, %v211
    %216 = vst.msk [vmem:[#allocation3 + $0x10] sm:$0xff] %vm213, %v212
    %v217 = vld [vmem:[#allocation4] sm:$0xff]
    %v218 = vld [vmem:[#allocation4 + $0x8] sm:$0xff]
    %v219 = vld [vmem:[#allocation4 + $0x10] sm:$0xff]
    %v220 = vld [vmem:[%s2] sm:$0xff]
    %v221 = vld [vmem:[%s2 + $0x8] sm:$0xff]
    %v222 = vld [vmem:[%s2 + $0x10] sm:$0xff]
    %223 = vset.pattern.permute.xlu0 0
    %224 = vperm.xlu0 %223, %v220
    %v225 = vpop.permute.xlu0 %224
    %226 = vset.pattern.permute.xlu0 0
    %227 = vperm.xlu0 %226, %v221
    %v228 = vpop.permute.xlu0 %227
    %229 = vset.pattern.permute.xlu0 0
    %230 = vperm.xlu0 %229, %v222
    %v231 = vpop.permute.xlu0 %230
    %vm232 = vcmp.eq.s32.totalorder %v148, %v225
    %vm233 = vcmp.eq.s32.totalorder %v148, %v228
    %vm234 = vcmp.eq.s32.totalorder %v148, %v231
    %v235 = vsel %vm232, %v150, 0.0
    %v236 = vsel %vm233, %v151, 0.0
    %v237 = vsel %vm234, %v152, 0.0
    %238 = vadd.xlane.f32.xlu0 %v235
    %v239 = vpop.xlane.xlu0 %238
    %240 = vadd.xlane.f32.xlu0 %v236
    %v241 = vpop.xlane.xlu0 %240
    %242 = vadd.xlane.f32.xlu0 %v237
    %v243 = vpop.xlane.xlu0 %242
    %v244 = vadd.f32 %v217, %v239
    %v245 = vadd.f32 %v218, %v241
    %v246 = vadd.f32 %v219, %v243
    %247 = vst.msk [vmem:[#allocation4] sm:$0xff] %vm213, %v244
    %248 = vst.msk [vmem:[#allocation4 + $0x8] sm:$0xff] %vm213, %v245
    %249 = vst.msk [vmem:[#allocation4 + $0x10] sm:$0xff] %vm213, %v246
    %250 = vst.msk [vmem:[#allocation2] sm:$0xff] %vm213, %v162
    %251 = vst.msk [vmem:[#allocation2 + $0x8] sm:$0xff] %vm213, %v163
    %252 = vst.msk [vmem:[#allocation2 + $0x10] sm:$0xff] %vm213, %v164
    // Predicated region
    $region22: #{tpu_custom_call.1} parent=1 // pred_check
      %p253 = pneg %p28
    $region23: #{tpu_custom_call.1} parent=1 // pred_check_branch
      %255 = sbr.rel (%p253) target = $region25
    $region24: #{tpu_custom_call.1} parent=1 // pred_region
      %s256 = smul.u32 0, 24
      %v257 = vlaneseq
      %v258 = vshrl.u32 %v257, 7
      %v259 = vadd.s32 %v258, 8
      %v260 = vadd.s32 %v258, 16
      %v261 = vstv %s256
      %v262 = vadd.s32 %v261, %v258
      %v263 = vadd.s32 %v261, %v259
      %v264 = vadd.s32 %v261, %v260
      %v265 = vld [vmem:[#allocation2] sm:$0xff]
      %v266 = vld [vmem:[#allocation2 + $0x8] sm:$0xff]
      %v267 = vld [vmem:[#allocation2 + $0x10] sm:$0xff]
      %v268 = vld [vmem:[#allocation3] sm:$0xff]
      %v269 = vld [vmem:[#allocation3 + $0x8] sm:$0xff]
      %v270 = vld [vmem:[#allocation3 + $0x10] sm:$0xff]
      %v271 = vlog2.pop %v268
      %v272 = vmul.f32 %v271, 0.6931472
      %v273 = vlog2.pop %v269
      %v274 = vmul.f32 %v273, 0.6931472
      %v275 = vlog2.pop %v270
      %v276 = vmul.f32 %v275, 0.6931472
      %v277 = vadd.f32 %v265, %v272
      %v278 = vadd.f32 %v266, %v274
      %v279 = vadd.f32 %v267, %v276
      %v280 = vld [vmem:[#allocation4] sm:$0xff]
      %v281 = vld [vmem:[#allocation4 + $0x8] sm:$0xff]
      %v282 = vld [vmem:[#allocation4 + $0x10] sm:$0xff]
      %v283 = vsub.f32 %v277, %v280
      %v284 = vsub.f32 %v278, %v281
      %v285 = vsub.f32 %v279, %v282
      %vm286 = vcmp.lt.s32.totalorder %v262, 18
      %vm287 = vcmp.lt.s32.totalorder %v263, 18
      %vm288 = vcmp.lt.s32.totalorder %v264, 18
      %v289 = vsel %vm286, %v283, 0.0
      %v290 = vsel %vm287, %v284, 0.0
      %v291 = vsel %vm288, %v285, 0.0
      %292 = vst.msk [vmem:[%s3] sm:$0xff] %vm213, %v289
      %293 = vst.msk [vmem:[%s3 + $0x8] sm:$0xff] %vm213, %v290
      %294 = vst.msk [vmem:[%s3 + $0x10] sm:$0xff] %vm213, %v291
    $region25: #{tpu_custom_call.1} parent=1 // pred_fallthru
      _
    // Predicated region
    $region26: #{tpu_custom_call.1} parent=1 // pred_check
      _
    $region27: #{tpu_custom_call.1} parent=1 // pred_check_branch
      %296 = sbr.rel (0) target = $region29
    $region28: #{tpu_custom_call.1} parent=1 // pred_region
      _
    $region29: #{tpu_custom_call.1} parent=1 // pred_fallthru
      _
    // Predicated region
    $region30: #{tpu_custom_call.1} parent=1 // pred_check
      _
    $region31: #{tpu_custom_call.1} parent=1 // pred_check_branch
      %298 = sbr.rel (0) target = $region33
    $region32: #{tpu_custom_call.1} parent=1 // pred_region
      _
    $region33: #{tpu_custom_call.1} parent=1 // pred_fallthru
      _
    %299 = vsyncpa [#allocation6], 1

</llo_original>
